<compile_context>
chip_gen: v6e
topology: v6e:2x2x1
jax: 0.10.0
libtpu: 0.0.40
codegen_flags: <defaults>
</compile_context>

<pallas_src>
import math

import jax
import jax.numpy as jnp
from jax import lax
from jax.experimental import pallas as pl
from jax.experimental.pallas import tpu as pltpu

LANES = 128
MAX_BLOCK_CHUNKS = 512            # (512, 8, 128) f32 = 2 MiB per input block


def _num_tensorcores_hint():
    """2 on v7x-class (2 TensorCores per chip), else 1 (v5e/v6e are 1-TC)."""
    try:
        kind = jax.devices()[0].device_kind.lower()
    except Exception:
        return 1
    return 2 if ("v7" in kind or "7x" in kind) else 1


def dice_loss(predict, target, epsilon=1e-5):
    """Forward pass of DiceLoss. `predict`/`target` may be any (same) shape."""
    assert predict.shape == target.shape, \
        "the size of predict and target must be equal."
    n = math.prod(predict.shape)

    x_flat = predict.reshape(-1)
    t_flat = target.reshape(-1)

    # dtype-dependent packing: one block row == one fully packed vreg.
    itemsize = jnp.dtype(predict.dtype).itemsize
    sublanes = 8 * max(1, 4 // itemsize)          # 8 (f32) / 16 (bf16) / 32 (i8)
    chunk = sublanes * LANES

    n_chunks = n // chunk
    rem = n - n_chunks * chunk

    inter = jnp.float32(0.0)
    union = jnp.float32(0.0)

    # Sub-chunk ragged tail: < one vreg-chunk of elements, plain jnp is fine
    # (no full-array pad, no extra HBM pass over the bulk).
    if rem:
        x_tail = x_flat[n - rem:].astype(jnp.float32)
        t_tail = t_flat[n - rem:].astype(jnp.float32)
        inter = inter + jnp.sum(x_tail * t_tail)
        union = union + jnp.sum(x_tail + t_tail)

    if n_chunks > 0:
        block_chunks = min(n_chunks, MAX_BLOCK_CHUNKS)
        num_blocks = -(-n_chunks // block_chunks)

        # 2-way TC split only where it pays off and never creates phantom blocks.
        num_shards = _num_tensorcores_hint()
        if num_blocks < num_shards or num_blocks % num_shards != 0:
            num_shards = 1
        blocks_per_shard = num_blocks // num_shards

        # Only the globally-last block can be partial; mask it in-kernel
        # (out-of-bounds block rows are undefined garbage -> must use where).
        need_mask = (n_chunks % block_chunks) != 0

        x_bulk = x_flat if rem == 0 else x_flat[: n_chunks * chunk]
        t_bulk = t_flat if rem == 0 else t_flat[: n_chunks * chunk]
        x3 = x_bulk.reshape(n_chunks, sublanes, LANES)
        t3 = t_bulk.reshape(n_chunks, sublanes, LANES)

        def kernel(x_ref, t_ref, inter_ref, union_ref):
            j = pl.program_id(1)

            @pl.when(j == 0)
            def _():
                inter_ref[...] = jnp.zeros_like(inter_ref)
                union_ref[...] = jnp.zeros_like(union_ref)

            x = x_ref[...].astype(jnp.float32)
            t = t_ref[...].astype(jnp.float32)

            if need_mask:  # static (trace-time) branch
                blk = pl.program_id(0) * blocks_per_shard + j
                valid = n_chunks - blk * block_chunks
                rows = lax.broadcasted_iota(jnp.int32, x.shape, 0)
                keep = rows < valid
                x = jnp.where(keep, x, 0.0)
                t = jnp.where(keep, t, 0.0)

            # Reduce only over the leading (chunk) axis: pure VPU adds, (8,128)
            # per-lane partials stay resident in the output refs across j.
            inter_ref[0] += jnp.sum(x * t, axis=0)
            union_ref[0] += jnp.sum(x + t, axis=0)

        in_blk = pl.BlockSpec(
            (block_chunks, sublanes, LANES),
            lambda c, j: (c * blocks_per_shard + j, 0, 0))
        out_blk = pl.BlockSpec((1, sublanes, LANES), lambda c, j: (c, 0, 0))

        bytes_in = n_chunks * chunk * (jnp.dtype(predict.dtype).itemsize
                                       + jnp.dtype(target.dtype).itemsize)
        cost = pl.CostEstimate(
            flops=4 * n_chunks * chunk,
            transcendentals=0,
            bytes_accessed=bytes_in + 2 * num_shards * sublanes * LANES * 4)

        inter_part, union_part = pl.pallas_call(
            kernel,
            out_shape=(
                jax.ShapeDtypeStruct((num_shards, sublanes, LANES), jnp.float32),
                jax.ShapeDtypeStruct((num_shards, sublanes, LANES), jnp.float32),
            ),
            grid_spec=pltpu.PrefetchScalarGridSpec(
                num_scalar_prefetch=0,
                grid=(num_shards, blocks_per_shard),
                in_specs=[in_blk, in_blk],
                out_specs=[out_blk, out_blk],
            ),
            compiler_params=pltpu.CompilerParams(
                dimension_semantics=("parallel", "arbitrary"),
                vmem_limit_bytes=32 * 1024 * 1024),
            cost_estimate=cost,
        )(x3, t3)

        # Tiny epilogue: cross-lane / cross-shard reduce in the wrapper.
        inter = inter + jnp.sum(inter_part)
        union = union + jnp.sum(union_part)

    eps = jnp.float32(epsilon)
    return 1.0 - 2.0 * (inter + eps) / (union + eps)


def _reference(predict, target, epsilon=1e-5):
    num = predict.shape[0]
    pre = predict.reshape(num, -1)
    tar = target.reshape(num, -1)
    intersection = (pre * tar).sum(-1).sum()
    union = (pre + tar).sum(-1).sum()
    return 1.0 - 2.0 * (intersection + epsilon) / (union + epsilon)


if __name__ == "__main__":
    key = jax.random.PRNGKey(0)
    k1, k2 = jax.random.split(key)

    shape = (2, 4, 16, 16)
    predict = jax.random.uniform(k1, shape, dtype=jnp.float32)           # probs
    target = jax.random.bernoulli(k2, p=0.5, shape=shape).astype(jnp.float32)

    out = dice_loss(predict, target)
    out = jax.block_until_ready(out)

    ref = _reference(predict, target)
    assert jnp.allclose(out, ref, rtol=1e-5, atol=1e-5), (out, ref)

    print("KERNEL_OK")
</pallas_src>

<mosaic_0001>
module attributes {stable_mosaic.version = 11 : i64} {
  func.func @kernel(%arg0: i32, %arg1: i32, %arg2: memref<2x8x128xf32, #tpu.memory_space<vmem>>, %arg3: memref<2x8x128xf32, #tpu.memory_space<vmem>>, %arg4: memref<1x8x128xf32, #tpu.memory_space<vmem>>, %arg5: memref<1x8x128xf32, #tpu.memory_space<vmem>>) attributes {dimension_semantics = [#tpu.dimension_semantics<parallel>, #tpu.dimension_semantics<arbitrary>], iteration_bounds = array<i64: 1, 1>, scalar_prefetch = 0 : i64, scratch_operands = 0 : i64, tpu.core_type = #tpu.core_type<tc>, window_params = [{transform_indices = @transform_0, window_bounds = array<i64: 2, 8, 128>}, {transform_indices = @transform_1, window_bounds = array<i64: 2, 8, 128>}, {transform_indices = @transform_2, window_bounds = array<i64: 1, 8, 128>}, {transform_indices = @transform_3, window_bounds = array<i64: 1, 8, 128>}]} {
    %c0_i32 = arith.constant 0 : i32
    %0 = arith.cmpi eq, %arg1, %c0_i32 : i32
    %1 = arith.extui %0 : i1 to i32
    %c0_i32_0 = arith.constant 0 : i32
    %2 = arith.cmpi ne, %1, %c0_i32_0 : i32
    scf.if %2 {
      %cst_19 = arith.constant 0.000000e+00 : f32
      %21 = vector.broadcast %cst_19 : f32 to vector<1x8x128xf32>
      %c0_20 = arith.constant 0 : index
      %c0_21 = arith.constant 0 : index
      %c0_22 = arith.constant 0 : index
      %22 = vector.load %arg4[%c0_20, %c0_21, %c0_22] : memref<1x8x128xf32, #tpu.memory_space<vmem>>, vector<1x8x128xf32>
      tpu.vector_store %arg4[%c0_20, %c0_21, %c0_22], %21 {strides = array<i32>} : memref<1x8x128xf32, #tpu.memory_space<vmem>>, vector<1x8x128xf32>,
      %cst_23 = arith.constant 0.000000e+00 : f32
      %23 = vector.broadcast %cst_23 : f32 to vector<1x8x128xf32>
      %c0_24 = arith.constant 0 : index
      %c0_25 = arith.constant 0 : index
      %c0_26 = arith.constant 0 : index
      %24 = vector.load %arg5[%c0_24, %c0_25, %c0_26] : memref<1x8x128xf32, #tpu.memory_space<vmem>>, vector<1x8x128xf32>
      tpu.vector_store %arg5[%c0_24, %c0_25, %c0_26], %23 {strides = array<i32>} : memref<1x8x128xf32, #tpu.memory_space<vmem>>, vector<1x8x128xf32>,
    } else {
    }
    %c0 = arith.constant 0 : index
    %c0_1 = arith.constant 0 : index
    %c0_2 = arith.constant 0 : index
    %3 = vector.load %arg2[%c0, %c0_1, %c0_2] : memref<2x8x128xf32, #tpu.memory_space<vmem>>, vector<2x8x128xf32>
    %c0_3 = arith.constant 0 : index
    %c0_4 = arith.constant 0 : index
    %c0_5 = arith.constant 0 : index
    %4 = vector.load %arg3[%c0_3, %c0_4, %c0_5] : memref<2x8x128xf32, #tpu.memory_space<vmem>>, vector<2x8x128xf32>
    %c0_6 = arith.constant 0 : index
    %c0_7 = arith.constant 0 : index
    %c0_8 = arith.constant 0 : index
    %5 = vector.load %arg4[%c0_6, %c0_7, %c0_8] : memref<1x8x128xf32, #tpu.memory_space<vmem>>, vector<1x8x128xf32>
    %6 = vector.shape_cast %5 : vector<1x8x128xf32> to vector<8x128xf32>
    %7 = arith.mulf %3, %4 : vector<2x8x128xf32>
    %cst = arith.constant dense<0.000000e+00> : vector<8x128xf32>
    %8 = vector.multi_reduction <add>, %7, %cst [0] : vector<2x8x128xf32> to vector<8x128xf32>
    %9 = arith.addf %6, %8 : vector<8x128xf32>
    %c0_9 = arith.constant 0 : index
    %c0_10 = arith.constant 0 : index
    %c0_11 = arith.constant 0 : index
    %10 = vector.load %arg4[%c0_9, %c0_10, %c0_11] : memref<1x8x128xf32, #tpu.memory_space<vmem>>, vector<1x8x128xf32>
    %11 = vector.shape_cast %10 : vector<1x8x128xf32> to vector<8x128xf32>
    %12 = vector.shape_cast %9 : vector<8x128xf32> to vector<1x8x128xf32>
    tpu.vector_store %arg4[%c0_9, %c0_10, %c0_11], %12 {strides = array<i32>} : memref<1x8x128xf32, #tpu.memory_space<vmem>>, vector<1x8x128xf32>,
    %c0_12 = arith.constant 0 : index
    %c0_13 = arith.constant 0 : index
    %c0_14 = arith.constant 0 : index
    %13 = vector.load %arg5[%c0_12, %c0_13, %c0_14] : memref<1x8x128xf32, #tpu.memory_space<vmem>>, vector<1x8x128xf32>
    %14 = vector.shape_cast %13 : vector<1x8x128xf32> to vector<8x128xf32>
    %15 = arith.addf %3, %4 : vector<2x8x128xf32>
    %cst_15 = arith.constant dense<0.000000e+00> : vector<8x128xf32>
    %16 = vector.multi_reduction <add>, %15, %cst_15 [0] : vector<2x8x128xf32> to vector<8x128xf32>
    %17 = arith.addf %14, %16 : vector<8x128xf32>
    %c0_16 = arith.constant 0 : index
    %c0_17 = arith.constant 0 : index
    %c0_18 = arith.constant 0 : index
    %18 = vector.load %arg5[%c0_16, %c0_17, %c0_18] : memref<1x8x128xf32, #tpu.memory_space<vmem>>, vector<1x8x128xf32>
    %19 = vector.shape_cast %18 : vector<1x8x128xf32> to vector<8x128xf32>
    %20 = vector.shape_cast %17 : vector<8x128xf32> to vector<1x8x128xf32>
    tpu.vector_store %arg5[%c0_16, %c0_17, %c0_18], %20 {strides = array<i32>} : memref<1x8x128xf32, #tpu.memory_space<vmem>>, vector<1x8x128xf32>,
    return
  }
  func.func @transform_0(%arg0: i32, %arg1: i32) -> (i32, i32, i32) {
    %c1_i32 = arith.constant 1 : i32
    %0 = arith.muli %arg0, %c1_i32 : i32
    %1 = arith.addi %0, %arg1 : i32
    %c0_i32 = arith.constant 0 : i32
    %c0_i32_0 = arith.constant 0 : i32
    %c0_i32_1 = arith.constant 0 : i32
    return %1, %c0_i32, %c0_i32_0 : i32, i32, i32
  }
  func.func @transform_1(%arg0: i32, %arg1: i32) -> (i32, i32, i32) {
    %c1_i32 = arith.constant 1 : i32
    %0 = arith.muli %arg0, %c1_i32 : i32
    %1 = arith.addi %0, %arg1 : i32
    %c0_i32 = arith.constant 0 : i32
    %c0_i32_0 = arith.constant 0 : i32
    %c0_i32_1 = arith.constant 0 : i32
    return %1, %c0_i32, %c0_i32_0 : i32, i32, i32
  }
  func.func @transform_2(%arg0: i32, %arg1: i32) -> (i32, i32, i32) {
    %c0_i32 = arith.constant 0 : i32
    %c0_i32_0 = arith.constant 0 : i32
    %c0_i32_1 = arith.constant 0 : i32
    return %arg0, %c0_i32, %c0_i32_0 : i32, i32, i32
  }
  func.func @transform_3(%arg0: i32, %arg1: i32) -> (i32, i32, i32) {
    %c0_i32 = arith.constant 0 : i32
    %c0_i32_0 = arith.constant 0 : i32
    %c0_i32_1 = arith.constant 0 : i32
    return %arg0, %c0_i32, %c0_i32_0 : i32, i32, i32
  }
}

</mosaic_0001>

<llo_original>
// kernel: tpu_custom_call.1
$region0: #{tpu_custom_call.1}
  #allocation0 [shape = 'u32[]', space=smem, size = 0x4, offset = 0x4, fixed_abs, tag = 'smem constant byte address 0x4 - core index']
  #allocation1 [shape = 'u32[144,128]{1,0:T(1,128)}', space=vmem, size = 0x12000, scoped, tag = 'internal scratch']
  %s0 = inlined_call_operand.hbm [shape: f32[2,8,128], index: 0, kind: input, shape index: {}]
  %s1 = inlined_call_operand.hbm [shape: f32[2,8,128], index: 1, kind: input, shape index: {}]
  %s2 = inlined_call_operand.hbm [shape: f32[1,8,128], index: 2, kind: output, shape index: {0}]
  %s3 = inlined_call_operand.hbm [shape: f32[1,8,128], index: 3, kind: output, shape index: {1}]
  %4 = xla_tuple %s2, %s3
  %s5 = sld [smem:[#allocation0]]
  $region38: #{tpu_custom_call.1} parent=0
    _
  %s7 = ssub.s32 1, %s5
  %s8 = scalar_select 0, %s7, %s5
  $region1: #{tpu_custom_call.1} parent=0
    #allocation2 [shape = 'u8[8192]{0}', space=vmem, size = 0x2000, scoped, tag = 'input window, operand 0, single buffered']
    #allocation3 [shape = 's32[1]{0}', space=sflag, size = 0x4, scoped, tag = 'scoped memory for tpu_custom_call.1']
    #allocation4 [shape = 's32[1]{0}', space=sflag, size = 0x4, scoped, tag = 'scoped memory for tpu_custom_call.1']
    #allocation5 [shape = 'u8[8192]{0}', space=vmem, size = 0x2000, scoped, tag = 'input window, operand 1, single buffered']
    #allocation6 [shape = 's32[1]{0}', space=sflag, size = 0x4, scoped, tag = 'scoped memory for tpu_custom_call.1']
    #allocation7 [shape = 'u8[4096]{0}', space=vmem, size = 0x1000, scoped, tag = 'output window, operand 0, single buffered']
    #allocation8 [shape = 'u8[4096]{0}', space=vmem, size = 0x1000, scoped, tag = 'output window, operand 1, single buffered']
    #allocation9 [shape = 's32[1]{0}', space=sflag, size = 0x4, scoped, tag = 'scoped memory for tpu_custom_call.1']
    %9 = vsyncpa [#allocation3], 0
    %10 = vsyncpa [#allocation6], 0
    %11 = vsyncpa [#allocation4], 0
    %12 = vsyncpa [#allocation9], 0
    // Predicated region
    $region2: #{tpu_custom_call.1} parent=1 // pred_check
      _
    $region3: #{tpu_custom_call.1} parent=1 // pred_check_branch
      %14 = sbr.rel (0) target = $region5
    $region4: #{tpu_custom_call.1} parent=1 // pred_region
      %s15 = sadd.s32 0, 0
      %s16 = smul.u32 2, %s15
      %s18 = ssub.s32 256, 256
      %19 = vsyncadd [#allocation3], %s18
      %s20 = smul.addr %s16, 128
      %s21 = scalar_lea.hbm %s0, %s20
      %s22 = sshll.u32 [#allocation2], 4
      %s23 = int_to_ptr.vmem [resolvable:$true] %s22
      %28 = dma.hbm_to_vmem [thread:$0]  %s21, 256, %s23, [#allocation3], 128, 128, 8
    $region5: #{tpu_custom_call.1} parent=1 // pred_fallthru
      _
    // Predicated region
    $region6: #{tpu_custom_call.1} parent=1 // pred_check
      _
    $region7: #{tpu_custom_call.1} parent=1 // pred_check_branch
      %30 = sbr.rel (0) target = $region9
    $region8: #{tpu_custom_call.1} parent=1 // pred_region
      %s31 = sadd.s32 0, 0
      %s32 = smul.u32 2, %s31
      %s34 = ssub.s32 256, 256
      %35 = vsyncadd [#allocation6], %s34
      %s36 = smul.addr %s32, 128
      %s37 = scalar_lea.hbm %s1, %s36
      %s38 = sshll.u32 [#allocation5], 4
      %s39 = int_to_ptr.vmem [resolvable:$true] %s38
      %44 = dma.hbm_to_vmem [thread:$0]  %s37, 256, %s39, [#allocation6], 128, 128, 8
    $region9: #{tpu_custom_call.1} parent=1 // pred_fallthru
      _
    // Predicated region
    $region10: #{tpu_custom_call.1} parent=1 // pred_check
      _
    $region11: #{tpu_custom_call.1} parent=1 // pred_check_branch
      %46 = sbr.rel (0) target = $region13
    $region12: #{tpu_custom_call.1} parent=1 // pred_region
      %47 = dma.done [#allocation3], 256
    $region13: #{tpu_custom_call.1} parent=1 // pred_fallthru
      _
    // Predicated region
    $region14: #{tpu_custom_call.1} parent=1 // pred_check
      _
    $region15: #{tpu_custom_call.1} parent=1 // pred_check_branch
      %49 = sbr.rel (0) target = $region17
    $region16: #{tpu_custom_call.1} parent=1 // pred_region
      %50 = dma.done [#allocation6], 256
    $region17: #{tpu_custom_call.1} parent=1 // pred_fallthru
      _
    %s51 = sadd.s32 0, 0
    %s52 = smul.u32 2, %s51
    %s53 = sadd.s32 0, 0
    %s54 = smul.u32 2, %s53
    %p55 = scmp.eq.s32.totalorder 0, 0
    // Predicated region
    $region18: #{tpu_custom_call.1} parent=1 // pred_check
      %p56 = pneg %p55
    $region19: #{tpu_custom_call.1} parent=1 // pred_check_branch
      %58 = sbr.rel (%p56) target = $region21
    $region20: #{tpu_custom_call.1} parent=1 // pred_region
      %59 = vst [vmem:[#allocation7] sm:$0xff] 0.0
      %60 = vst [vmem:[#allocation8] sm:$0xff] 0.0
    $region21: #{tpu_custom_call.1} parent=1 // pred_fallthru
      _
    %v61 = vld [vmem:[#allocation2] sm:$0xff]
    %v62 = vld [vmem:[#allocation2 + $0x8] sm:$0xff]
    %v63 = vld [vmem:[#allocation5] sm:$0xff]
    %v64 = vld [vmem:[#allocation5 + $0x8] sm:$0xff]
    %v65 = vld [vmem:[#allocation7] sm:$0xff]
    %v66 = vmul.f32 %v61, %v63
    %v67 = vmul.f32 %v62, %v64
    %v68 = vadd.f32 %v66, %v67
    %v69 = vadd.f32 %v65, %v68
    %70 = vst [vmem:[#allocation7] sm:$0xff] %v69
    %v71 = vld [vmem:[#allocation8] sm:$0xff]
    %v72 = vadd.f32 %v61, %v63
    %v73 = vadd.f32 %v62, %v64
    %v74 = vadd.f32 %v72, %v73
    %v75 = vadd.f32 %v71, %v74
    %76 = vst [vmem:[#allocation8] sm:$0xff] %v75
    // Predicated region
    $region22: #{tpu_custom_call.1} parent=1 // pred_check
      _
    $region23: #{tpu_custom_call.1} parent=1 // pred_check_branch
      %78 = sbr.rel (0) target = $region25
    $region24: #{tpu_custom_call.1} parent=1 // pred_region
      %s80 = ssub.s32 128, 128
      %81 = vsyncadd [#allocation4], %s80
      %s83 = sshll.u32 [#allocation7], 4
      %s84 = int_to_ptr.vmem [resolvable:$true] %s83
      %86 = dma.vmem_to_hbm [thread:$0]  %s84, 128, %s2, [#allocation4]
    $region25: #{tpu_custom_call.1} parent=1 // pred_fallthru
      _
    // Predicated region
    $region26: #{tpu_custom_call.1} parent=1 // pred_check
      _
    $region27: #{tpu_custom_call.1} parent=1 // pred_check_branch
      %88 = sbr.rel (0) target = $region29
    $region28: #{tpu_custom_call.1} parent=1 // pred_region
      %s90 = ssub.s32 128, 128
      %91 = vsyncadd [#allocation9], %s90
      %s93 = sshll.u32 [#allocation8], 4
      %s94 = int_to_ptr.vmem [resolvable:$true] %s93
      %96 = dma.vmem_to_hbm [thread:$0]  %s94, 128, %s3, [#allocation9]
    $region29: #{tpu_custom_call.1} parent=1 // pred_fallthru
      _
    // Predicated region
    $region30: #{tpu_custom_call.1} parent=1 // pred_check
      _
    $region31: #{tpu_custom_call.1} parent=1 // pred_check_branch
      %98 = sbr.rel (0) target = $region33
    $region32: #{tpu_custom_call.1} parent=1 // pred_region
      %99 = dma.done [#allocation4], 128
    $region33: #{tpu_custom_call.1} parent=1 // pred_fallthru
      _
    // Predicated region
    $region34: #{tpu_custom_call.1} parent=1 // pred_check
      _
    $region35: #{tpu_custom_call.1} parent=1 // pred_check_branch
      %101 = sbr.rel (0) target = $region37
    $region36: #{tpu_custom_call.1} parent=1 // pred_region
      %102 = dma.done [#allocation9], 128
    $region37: #{tpu_custom_call.1} parent=1 // pred_fallthru
      _
    %103 = vsyncpa [#allocation3], 1
    %104 = vsyncpa [#allocation6], 1
    %105 = vsyncpa [#allocation4], 1
    %106 = vsyncpa [#allocation9], 1

</llo_original>
